<compile_context>
chip_gen: v5e
topology: v5e:2x2
jax: 0.10.0
libtpu: 0.0.40
codegen_flags: <defaults>
</compile_context>

<pallas_src>
import jax
import jax.numpy as jnp
from jax.experimental import pallas as pl
from jax.experimental.pallas import tpu as pltpu


_MIN_GRID_STEPS = 8                      # >= 4 steps per TensorCore on a 2-TC (v7x) chip
_TARGET_BLOCK_BYTES = 2 * 1024 * 1024    # ~2 MiB x blocks ~= HBM roofline knee


# ----------------------------------------------------------------------------
# helpers
# ----------------------------------------------------------------------------
def _round_up(x: int, m: int) -> int:
    return ((x + m - 1) // m) * m


def _vmem_budget_bytes() -> int:
    """Conservative per-TensorCore scoped-VMEM limit, safe on v5e/v6e/v7x."""
    cap = 0
    get_info = getattr(pltpu, "get_tpu_info", None)
    if get_info is not None:
        try:
            cap = int(getattr(get_info(), "vmem_capacity_bytes", 0) or 0)
        except Exception:
            cap = 0
    if cap <= 0:
        cap = 64 * 1024 * 1024           # most conservative physical per-TC VMEM (v7x)
    # get_tpu_info may report per-chip capacity on 2-TC chips; hard-cap at 56 MiB
    # so the scoped limit never exceeds v7x's 64 MiB physical per-core VMEM.
    return int(min(0.75 * cap, 56 * 1024 * 1024))


# ----------------------------------------------------------------------------
# fused single-pass kernel (auto-pipelined): whole (bb, C, L) slab per grid step
# ----------------------------------------------------------------------------
def _se_fused_kernel(x_ref, w1t_ref, b1_ref, w2t_ref, b2_ref, o_ref):
    x = x_ref[...]                                            # (bb, C, L), input dtype
    # squeeze: f32 accumulation without materializing an f32 copy of the block.
    s = jnp.sum(x, axis=2, dtype=jnp.float32)                 # (bb, C)
    # excitation (1/L folded into w1t by the wrapper), batched over the bb block.
    h = jnp.dot(s, w1t_ref[...], preferred_element_type=jnp.float32) + b1_ref[...]
    h = jnp.maximum(h, 0.0)                                   # (bb, SE)
    g = jnp.dot(h, w2t_ref[...], preferred_element_type=jnp.float32) + b2_ref[...]
    g = 1.0 / (1.0 + jnp.exp(-g))                             # sigmoid, (bb, CO) f32
    # scale in the input dtype (keeps bf16 packed on the VALU, no f32 temp).
    o_ref[...] = (g.astype(x.dtype)[:, :, None] * x).astype(o_ref.dtype)


# ----------------------------------------------------------------------------
# fused single-buffered kernel (manual DMA): slab fits once in VMEM but not 2x
# ----------------------------------------------------------------------------
def _se_fused_manual_kernel(x_hbm, w1t_ref, b1_ref, w2t_ref, b2_ref, o_hbm,
                            xbuf, obuf, in_sem, out_sem):
    b = pl.program_id(0)
    nb = pl.num_programs(0)

    # Wait for the previous step's output writeback before reusing obuf
    # (lets the output DMA overlap the next step's input DMA + compute).
    @pl.when(b > 0)
    def _():
        pltpu.make_async_copy(obuf, o_hbm.at[pl.ds(b - 1, 1)], out_sem).wait()

    cp_in = pltpu.make_async_copy(x_hbm.at[pl.ds(b, 1)], xbuf, in_sem)
    cp_in.start()
    cp_in.wait()

    x = xbuf[...]                                             # (1, C, L)
    s = jnp.sum(x, axis=2, dtype=jnp.float32)                 # (1, C)
    h = jnp.dot(s, w1t_ref[...], preferred_element_type=jnp.float32) + b1_ref[...]
    h = jnp.maximum(h, 0.0)
    g = jnp.dot(h, w2t_ref[...], preferred_element_type=jnp.float32) + b2_ref[...]
    g = 1.0 / (1.0 + jnp.exp(-g))                             # (1, CO)
    obuf[...] = (g.astype(x.dtype)[:, :, None] * x).astype(obuf.dtype)

    pltpu.make_async_copy(obuf, o_hbm.at[pl.ds(b, 1)], out_sem).start()

    @pl.when(b == nb - 1)
    def _():
        pltpu.make_async_copy(obuf, o_hbm.at[pl.ds(b, 1)], out_sem).wait()


def _se_block_manual_single_buffer(x, w1t, b1r, w2t, b2r, *, vmem_limit):
    B, C, L = x.shape
    SE = w1t.shape[1]
    CO = w2t.shape[1]
    return pl.pallas_call(
        _se_fused_manual_kernel,
        out_shape=jax.ShapeDtypeStruct((B, CO, L), x.dtype),
        grid=(B,),
        in_specs=[
            pl.BlockSpec(memory_space=pl.ANY),                # x stays in HBM
            pl.BlockSpec((C, SE), lambda b: (0, 0)),
            pl.BlockSpec((1, SE), lambda b: (0, 0)),
            pl.BlockSpec((SE, CO), lambda b: (0, 0)),
            pl.BlockSpec((1, CO), lambda b: (0, 0)),
        ],
        out_specs=pl.BlockSpec(memory_space=pl.ANY),          # written via manual DMA
        scratch_shapes=[
            pltpu.VMEM((1, C, L), x.dtype),
            pltpu.VMEM((1, CO, L), x.dtype),
            pltpu.SemaphoreType.DMA(()),
            pltpu.SemaphoreType.DMA(()),
        ],
        compiler_params=pltpu.CompilerParams(
            dimension_semantics=("arbitrary",),               # sequential: sems/buffers carry
            vmem_limit_bytes=vmem_limit),
    )(x, w1t, b1r, w2t, b2r)


# ----------------------------------------------------------------------------
# two-pass path (very large C*L): pass 1 = tiled sums over L, pass 2 = g * x
# ----------------------------------------------------------------------------
def _make_sum_kernel(l_total: int, l_tile: int, nl: int):
    need_mask = (l_total % l_tile) != 0

    def kernel(x_ref, sum_ref):
        li = pl.program_id(1)

        @pl.when(li == 0)
        def _():
            sum_ref[...] = jnp.zeros_like(sum_ref)

        x = x_ref[...]                                        # (bb, C, lt), input dtype
        partial = jnp.sum(x, axis=2, dtype=jnp.float32)       # (bb, C)
        if need_mask:
            # Only the last L tile reads past the valid length -> mask only there.
            def _masked(_):
                lane = jax.lax.broadcasted_iota(jnp.int32, x.shape, 2)
                xm = jnp.where(li * l_tile + lane < l_total, x, jnp.zeros_like(x))
                return jnp.sum(xm, axis=2, dtype=jnp.float32)

            partial = jax.lax.cond(li == nl - 1, _masked, lambda _: partial, None)
        # lane-dense accumulation/store: C sits on the lane axis of (bb, 1, C)
        sum_ref[...] += partial[:, None, :]

    return kernel


def _se_scale_kernel(g_ref, x_ref, o_ref):
    # g: (bb, C, 1) already in the input dtype; broadcast over the lane axis.
    o_ref[...] = (g_ref[...] * x_ref[...]).astype(o_ref.dtype)


def _se_block_two_pass(x, w1, b1, w2, b2, *, bb, lt, vmem_limit):
    B, C, L = x.shape
    CO = w2.shape[0]
    nb = pl.cdiv(B, bb)
    nl = pl.cdiv(L, lt)

    # --- pass 1: per-(batch, channel) sums over L, f32 accumulation ----------
    sums = pl.pallas_call(
        _make_sum_kernel(L, lt, nl),
        out_shape=jax.ShapeDtypeStruct((B, 1, C), jnp.float32),
        grid=(nb, nl),
        in_specs=[pl.BlockSpec((bb, C, lt), lambda b, l: (b, 0, l))],
        out_specs=pl.BlockSpec((bb, 1, C), lambda b, l: (b, 0, 0)),
        compiler_params=pltpu.CompilerParams(
            dimension_semantics=("parallel", "arbitrary"),
            vmem_limit_bytes=vmem_limit),
    )(x)

    # --- tiny excitation, batched over all B at once in plain JAX ------------
    means = sums[:, 0, :] * (1.0 / L)                         # (B, C) f32
    h = jnp.maximum(means @ w1.T + b1[None, :], 0.0)          # (B, SE)
    g = jax.nn.sigmoid(h @ w2.T + b2[None, :])                # (B, CO)
    g = g.astype(x.dtype)[:, :, None]                         # (B, CO, 1), input dtype

    # --- pass 2: stream g * x over the same L tiles ---------------------------
    out = pl.pallas_call(
        _se_scale_kernel,
        out_shape=jax.ShapeDtypeStruct((B, CO, L), x.dtype),
        grid=(nb, nl),
        in_specs=[pl.BlockSpec((bb, CO, 1), lambda b, l: (b, 0, 0)),
                  pl.BlockSpec((bb, C, lt), lambda b, l: (b, 0, l))],
        out_specs=pl.BlockSpec((bb, CO, lt), lambda b, l: (b, 0, l)),
        compiler_params=pltpu.CompilerParams(
            dimension_semantics=("parallel", "parallel"),
            vmem_limit_bytes=vmem_limit),
    )(g, x)
    return out


# ----------------------------------------------------------------------------
# public wrapper
# ----------------------------------------------------------------------------
def se_block_pallas(x, w1, b1, w2, b2, *,
                    force_two_pass=False, force_single_buffer=False,
                    force_bb=None, force_lt=None):
    """x: (B, C, L). w1: (SE, C), b1: (SE,), w2: (C_OUT, SE), b2: (C_OUT,)."""
    B, C, L = x.shape
    SE = w1.shape[0]
    CO = w2.shape[0]
    assert CO == C, "broadcast s * x requires out_channels == in_channels"

    itemsize = jnp.dtype(x.dtype).itemsize
    vmem_limit = _vmem_budget_bytes()
    budget = vmem_limit - 2 * 1024 * 1024    # headroom: weights + Mosaic internal scratch
    slab_bytes = C * L * itemsize            # one batch element, one buffer (in or out)

    # Weights for the fused kernels: 1/L folded into w1, transposed so the
    # excitation is a plain (bb, C) @ (C, SE) batched matmul; biases as rows.
    w1t = (w1 * (1.0 / L)).T                 # (C, SE)
    b1r = b1.reshape(1, SE)
    w2t = w2.T                               # (SE, CO)
    b2r = b2.reshape(1, CO)

    fits_double = 4 * slab_bytes <= budget   # in + out, double-buffered
    fits_single = 2 * slab_bytes <= budget   # in + out, single-buffered

    # --- fused, auto-pipelined (double-buffered) path -------------------------
    if not force_two_pass and not force_single_buffer and fits_double:
        if force_bb is not None:
            bb = force_bb
        else:
            bb = max(1, min(_TARGET_BLOCK_BYTES // slab_bytes,
                            budget // (4 * slab_bytes)))
            bb = min(bb, B)
            # Keep >= _MIN_GRID_STEPS grid steps (when B allows) so the pipeline
            # overlaps and both v7x TensorCores get work from the parallel axis.
            bb = max(1, min(bb, -(-B // _MIN_GRID_STEPS)))
        nb = pl.cdiv(B, bb)
        return pl.pallas_call(
            _se_fused_kernel,
            out_shape=jax.ShapeDtypeStruct((B, CO, L), x.dtype),
            grid=(nb,),
            in_specs=[
                pl.BlockSpec((bb, C, L), lambda b: (b, 0, 0)),
                pl.BlockSpec((C, SE), lambda b: (0, 0)),
                pl.BlockSpec((1, SE), lambda b: (0, 0)),
                pl.BlockSpec((SE, CO), lambda b: (0, 0)),
                pl.BlockSpec((1, CO), lambda b: (0, 0)),
            ],
            out_specs=pl.BlockSpec((bb, CO, L), lambda b: (b, 0, 0)),
            compiler_params=pltpu.CompilerParams(
                dimension_semantics=("parallel",),
                vmem_limit_bytes=vmem_limit),
        )(x, w1t, b1r, w2t, b2r)

    # --- fused, single-buffered manual-DMA path (v7x VMEM boundary regime) ----
    if not force_two_pass and fits_single:
        return _se_block_manual_single_buffer(x, w1t, b1r, w2t, b2r,
                                              vmem_limit=vmem_limit)

    # --- two-pass L-tiled fallback ---------------------------------------------
    if force_lt is not None:
        lt = force_lt
    else:
        row_floor = _round_up(2048 // itemsize, 128)          # >= 2 KiB strided-DMA rows
        lt = max(row_floor, (_TARGET_BLOCK_BYTES // (C * itemsize)) // 128 * 128)
        while lt > 128 and 4 * C * lt * itemsize > budget:    # keep double-buffered blocks in VMEM
            lt = max(128, (lt // 2) // 128 * 128)
        if lt >= L:
            lt = L                                            # full-extent dim is always legal
    bb = force_bb if force_bb is not None else 1
    return _se_block_two_pass(x, w1, b1, w2, b2, bb=bb, lt=lt, vmem_limit=vmem_limit)


def se_block_ref(x, w1, b1, w2, b2):
    """Pure-JAX reference matching the PyTorch forward."""
    s = jnp.mean(x, axis=2, keepdims=True)                               # (B, C, 1)
    s = jnp.maximum(jnp.einsum("oc,bcl->bol", w1, s) + b1[None, :, None], 0.0)
    s = jax.nn.sigmoid(jnp.einsum("os,bsl->bol", w2, s) + b2[None, :, None])
    return s * x


if __name__ == "__main__":
    key = jax.random.PRNGKey(0)
    ks = jax.random.split(key, 10)

    # --- config 1: tiny shapes (SEBlock_Export(4, 8, 4)) ----------------------
    B, C_IN, SE_CH, C_OUT, L = 2, 4, 8, 4, 16
    x = jax.random.normal(ks[0], (B, C_IN, L), dtype=jnp.float32)
    bound1 = 1.0 / (C_IN ** 0.5)
    w1 = jax.random.uniform(ks[1], (SE_CH, C_IN), jnp.float32, -bound1, bound1)
    b1 = jax.random.uniform(ks[2], (SE_CH,), jnp.float32, -bound1, bound1)
    bound2 = 1.0 / (SE_CH ** 0.5)
    w2 = jax.random.uniform(ks[3], (C_OUT, SE_CH), jnp.float32, -bound2, bound2)
    b2 = jax.random.uniform(ks[4], (C_OUT,), jnp.float32, -bound2, bound2)

    ref = se_block_ref(x, w1, b1, w2, b2)

    # fused auto-pipelined path
    out = jax.block_until_ready(se_block_pallas(x, w1, b1, w2, b2))
    assert out.shape == (B, C_OUT, L)
    assert jnp.allclose(out, ref, atol=1e-5, rtol=1e-5), "fused path mismatch"

    # single-buffered manual-DMA path (the v7x VMEM-boundary regime)
    out_sb = jax.block_until_ready(
        se_block_pallas(x, w1, b1, w2, b2, force_single_buffer=True))
    assert jnp.allclose(out_sb, ref, atol=1e-5, rtol=1e-5), "single-buffer path mismatch"

    # --- config 2: two-pass L-tiled path with partial batch & L tiles ---------
    B2, C2, SE2, L2 = 3, 8, 16, 384
    x2 = jax.random.normal(ks[5], (B2, C2, L2), dtype=jnp.float32)
    bo1 = 1.0 / (C2 ** 0.5)
    w1b = jax.random.uniform(ks[6], (SE2, C2), jnp.float32, -bo1, bo1)
    b1b = jax.random.uniform(ks[7], (SE2,), jnp.float32, -bo1, bo1)
    bo2 = 1.0 / (SE2 ** 0.5)
    w2b = jax.random.uniform(ks[8], (C2, SE2), jnp.float32, -bo2, bo2)
    b2b = jax.random.uniform(ks[9], (C2,), jnp.float32, -bo2, bo2)

    out2 = jax.block_until_ready(
        se_block_pallas(x2, w1b, b1b, w2b, b2b,
                        force_two_pass=True, force_bb=2, force_lt=256))
    ref2 = se_block_ref(x2, w1b, b1b, w2b, b2b)
    assert jnp.allclose(out2, ref2, atol=1e-5, rtol=1e-5), "two-pass mismatch"

    print("KERNEL_OK")
</pallas_src>

<mosaic_0001>
module attributes {stable_mosaic.version = 11 : i64} {
  func.func @_se_fused_kernel(%arg0: i32, %arg1: memref<1x4x16xf32, #tpu.memory_space<vmem>>, %arg2: memref<4x8xf32, #tpu.memory_space<vmem>>, %arg3: memref<1x8xf32, #tpu.memory_space<vmem>>, %arg4: memref<8x4xf32, #tpu.memory_space<vmem>>, %arg5: memref<1x4xf32, #tpu.memory_space<vmem>>, %arg6: memref<1x4x16xf32, #tpu.memory_space<vmem>>) attributes {dimension_semantics = [#tpu.dimension_semantics<parallel>], iteration_bounds = array<i64: 2>, scalar_prefetch = 0 : i64, scratch_operands = 0 : i64, tpu.core_type = #tpu.core_type<tc>, window_params = [{transform_indices = @transform_0, window_bounds = array<i64: 1, 4, 16>}, {pipeline_mode = #tpu.pipeline_mode<synchronous>, transform_indices = @transform_1, window_bounds = array<i64: 4, 8>}, {pipeline_mode = #tpu.pipeline_mode<synchronous>, transform_indices = @transform_2, window_bounds = array<i64: 1, 8>}, {pipeline_mode = #tpu.pipeline_mode<synchronous>, transform_indices = @transform_3, window_bounds = array<i64: 8, 4>}, {pipeline_mode = #tpu.pipeline_mode<synchronous>, transform_indices = @transform_4, window_bounds = array<i64: 1, 4>}, {transform_indices = @transform_5, window_bounds = array<i64: 1, 4, 16>}]} {
    %c0 = arith.constant 0 : index
    %c0_0 = arith.constant 0 : index
    %c0_1 = arith.constant 0 : index
    %0 = vector.load %arg1[%c0, %c0_0, %c0_1] : memref<1x4x16xf32, #tpu.memory_space<vmem>>, vector<1x4x16xf32>
    %cst = arith.constant dense<0.000000e+00> : vector<1x4xf32>
    %1 = vector.multi_reduction <add>, %0, %cst [2] : vector<1x4x16xf32> to vector<1x4xf32>
    %c0_2 = arith.constant 0 : index
    %c0_3 = arith.constant 0 : index
    %2 = vector.load %arg2[%c0_2, %c0_3] : memref<4x8xf32, #tpu.memory_space<vmem>>, vector<4x8xf32>
    %cst_4 = arith.constant dense<0.000000e+00> : vector<1x8xf32>
    %3 = tpu.matmul %1, %2, %cst_4 {dimension_numbers = #tpu.dot_dimension_numbers<[1], [0], [0], [1], [0, 0, 1, 1], [], []>} : vector<1x4xf32>, vector<4x8xf32>, vector<1x8xf32> -> vector<1x8xf32>
    %c0_5 = arith.constant 0 : index
    %c0_6 = arith.constant 0 : index
    %4 = vector.load %arg3[%c0_5, %c0_6] : memref<1x8xf32, #tpu.memory_space<vmem>>, vector<1x8xf32>
    %5 = arith.addf %3, %4 : vector<1x8xf32>
    %cst_7 = arith.constant 0.000000e+00 : f32
    %6 = vector.broadcast %cst_7 : f32 to vector<1x8xf32>
    %7 = arith.maximumf %5, %6 : vector<1x8xf32>
    %c0_8 = arith.constant 0 : index
    %c0_9 = arith.constant 0 : index
    %8 = vector.load %arg4[%c0_8, %c0_9] : memref<8x4xf32, #tpu.memory_space<vmem>>, vector<8x4xf32>
    %cst_10 = arith.constant dense<0.000000e+00> : vector<1x4xf32>
    %9 = tpu.matmul %7, %8, %cst_10 {dimension_numbers = #tpu.dot_dimension_numbers<[1], [0], [0], [1], [0, 0, 1, 1], [], []>} : vector<1x8xf32>, vector<8x4xf32>, vector<1x4xf32> -> vector<1x4xf32>
    %c0_11 = arith.constant 0 : index
    %c0_12 = arith.constant 0 : index
    %10 = vector.load %arg5[%c0_11, %c0_12] : memref<1x4xf32, #tpu.memory_space<vmem>>, vector<1x4xf32>
    %11 = arith.addf %9, %10 : vector<1x4xf32>
    %cst_13 = arith.constant 0.000000e+00 : f32
    %12 = vector.broadcast %cst_13 : f32 to vector<1x4xf32>
    %13 = arith.subf %12, %11 : vector<1x4xf32>
    %14 = math.exp %13 : vector<1x4xf32>
    %cst_14 = arith.constant 1.000000e+00 : f32
    %15 = vector.broadcast %cst_14 : f32 to vector<1x4xf32>
    %16 = arith.addf %15, %14 : vector<1x4xf32>
    %cst_15 = arith.constant 1.000000e+00 : f32
    %17 = vector.broadcast %cst_15 : f32 to vector<1x4xf32>
    %18 = arith.divf %17, %16 : vector<1x4xf32>
    %19 = vector.shape_cast %18 : vector<1x4xf32> to vector<1x4x1xf32>
    %20 = vector.broadcast %19 : vector<1x4x1xf32> to vector<1x4x16xf32>
    %21 = arith.mulf %20, %0 : vector<1x4x16xf32>
    %c0_16 = arith.constant 0 : index
    %c0_17 = arith.constant 0 : index
    %c0_18 = arith.constant 0 : index
    %22 = vector.load %arg6[%c0_16, %c0_17, %c0_18] : memref<1x4x16xf32, #tpu.memory_space<vmem>>, vector<1x4x16xf32>
    tpu.vector_store %arg6[%c0_16, %c0_17, %c0_18], %21 {strides = array<i32>} : memref<1x4x16xf32, #tpu.memory_space<vmem>>, vector<1x4x16xf32>,
    return
  }
  func.func @transform_0(%arg0: i32) -> (i32, i32, i32) {
    %c0_i32 = arith.constant 0 : i32
    %c0_i32_0 = arith.constant 0 : i32
    %c0_i32_1 = arith.constant 0 : i32
    return %arg0, %c0_i32, %c0_i32_0 : i32, i32, i32
  }
  func.func @transform_1(%arg0: i32) -> (i32, i32) {
    %c0_i32 = arith.constant 0 : i32
    %c0_i32_0 = arith.constant 0 : i32
    %c0_i32_1 = arith.constant 0 : i32
    return %c0_i32, %c0_i32_0 : i32, i32
  }
  func.func @transform_2(%arg0: i32) -> (i32, i32) {
    %c0_i32 = arith.constant 0 : i32
    %c0_i32_0 = arith.constant 0 : i32
    %c0_i32_1 = arith.constant 0 : i32
    return %c0_i32, %c0_i32_0 : i32, i32
  }
  func.func @transform_3(%arg0: i32) -> (i32, i32) {
    %c0_i32 = arith.constant 0 : i32
    %c0_i32_0 = arith.constant 0 : i32
    %c0_i32_1 = arith.constant 0 : i32
    return %c0_i32, %c0_i32_0 : i32, i32
  }
  func.func @transform_4(%arg0: i32) -> (i32, i32) {
    %c0_i32 = arith.constant 0 : i32
    %c0_i32_0 = arith.constant 0 : i32
    %c0_i32_1 = arith.constant 0 : i32
    return %c0_i32, %c0_i32_0 : i32, i32
  }
  func.func @transform_5(%arg0: i32) -> (i32, i32, i32) {
    %c0_i32 = arith.constant 0 : i32
    %c0_i32_0 = arith.constant 0 : i32
    %c0_i32_1 = arith.constant 0 : i32
    return %arg0, %c0_i32, %c0_i32_0 : i32, i32, i32
  }
}

</mosaic_0001>

<llo_original>
// kernel: tpu_custom_call.1
$region0: #{tpu_custom_call.1}
  #allocation0 [shape = 'u32[]', space=smem, size = 0x4, offset = 0x4, fixed_abs, tag = 'smem constant byte address 0x4 - core index']
  #allocation1 [shape = 'u32[72,128]{1,0:T(1,128)}', space=vmem, size = 0x9000, scoped, tag = 'internal scratch']
  %s0 = inlined_call_operand.vmem [shape: f32[2,4,16], index: 0, kind: input, shape index: {}]
  %s1 = inlined_call_operand.vmem [shape: f32[4,8], index: 1, kind: input, shape index: {}]
  %s2 = inlined_call_operand.vmem [shape: f32[1,8], index: 2, kind: input, shape index: {}]
  %s3 = inlined_call_operand.vmem [shape: f32[8,4], index: 3, kind: input, shape index: {}]
  %s4 = inlined_call_operand.vmem [shape: f32[1,4], index: 4, kind: input, shape index: {}]
  %s5 = inlined_call_operand.hbm [shape: f32[2,4,16], index: 5, kind: output, shape index: {}]
  %s6 = sld [smem:[#allocation0]]
  $region53: #{tpu_custom_call.1} parent=0
    _
  %s8 = ssub.s32 1, %s6
  %s9 = scalar_select 0, %s8, %s6
  $region1: #{tpu_custom_call.1} parent=0
    #allocation2 [shape = 'u8[4096]{0}', space=vmem, size = 0x1000, scoped, tag = 'output window, operand 0']
    #allocation3 [shape = 's32[2]{0}', space=sflag, size = 0x8, scoped, tag = 'scoped memory for tpu_custom_call.1']
    %10 = vsyncpa [#allocation3], 0
    %s11 = scalar_lea.sflag [#allocation3], 1
    %12 = vsyncpa %s11, 0
    loop: start=0, step=1, limit=4
    $region2: #{tpu_custom_call.1} parent=1 // loop_pre_header
      _
    $region3: #{tpu_custom_call.1} parent=1 // loop_header
      %s14 = sphi 0, %s18
      %p15 = scmp.ge.s32.totalorder %s14, 4
      %s24 = sphi 0, %s26
      %s27 = sphi 0, %s24
      %s28 = sphi 0, %s27
      %s44 = sphi 0, %s28
      %s48 = sphi 0, %s48
      %s50 = sphi 0, %s48
      %s51 = sphi 0, %s50
      %s65 = sphi 0, %s51
      %s69 = sphi 0, %s69
      %s71 = sphi 0, %s69
      %s72 = sphi 0, %s71
      %s86 = sphi 0, %s72
      %s90 = sphi 0, %s90
      %s92 = sphi 0, %s90
      %s93 = sphi 0, %s92
      %s107 = sphi 0, %s93
      %s111 = sphi 0, %s111
      %s113 = sphi 0, %s111
      %s114 = sphi 0, %s113
      %s128 = sphi 0, %s114
      %s134 = sphi 0, %s136
      %s137 = sphi 0, %s134
      %s138 = sphi 0, %s137
      %s154 = sphi 0, %s138
    $region4: #{tpu_custom_call.1} parent=1 // loop_header_branch
      %17 = sbr.rel (%p15) target = $region8
    $region5: #{tpu_custom_call.1} parent=1 // loop_body
      %s19 = ssub.s32 %s14, 1
      %s20 = ssub.s32 %s14, 2
      %s21 = sadd.s32 %s14, 1
      %s22 = ssub.s32 %s14, %s21
      %p23 = scmp.eq.s32.totalorder %s22, 0
      %s25 = sadd.s32 %s24, 1
      %s26 = scalar_select %p23, %s24, %s25
      %p29 = pneg %p23
      %p30 = scmp.eq.s32.totalorder %s14, 1
      %p31 = por %p29, %p30
      %p32 = scmp.ne.s32.totalorder %s24, %s27
      %p33 = scmp.eq.s32.totalorder %s14, 0
      %p34 = por %p32, %p33
      %p35 = scmp.ne.s32.totalorder %s24, %s27
      %p36 = scmp.eq.s32.totalorder %s19, 1
      %p37 = por %p35, %p36
      %p38 = scmp.ne.s32.totalorder %s27, %s28
      %p39 = scmp.eq.s32.totalorder %s19, 0
      %p40 = por %p38, %p39
      %p41 = scmp.ne.s32.totalorder %s27, %s28
      %p42 = scmp.eq.s32.totalorder %s20, 1
      %p43 = por %p41, %p42
      %p45 = scmp.ne.s32.totalorder %s28, %s44
      %p46 = scmp.eq.s32.totalorder %s20, 0
      %p47 = por %p45, %p46
      %s49 = sadd.s32 %s48, 1
      %p52 = scmp.eq.s32.totalorder %s14, 1
      %p53 = scmp.ne.s32.totalorder %s48, %s50
      %p54 = scmp.eq.s32.totalorder %s14, 0
      %p55 = por %p53, %p54
      %p56 = scmp.ne.s32.totalorder %s48, %s50
      %p57 = scmp.eq.s32.totalorder %s19, 1
      %p58 = por %p56, %p57
      %p59 = scmp.ne.s32.totalorder %s50, %s51
      %p60 = scmp.eq.s32.totalorder %s19, 0
      %p61 = por %p59, %p60
      %p62 = scmp.ne.s32.totalorder %s50, %s51
      %p63 = scmp.eq.s32.totalorder %s20, 1
      %p64 = por %p62, %p63
      %p66 = scmp.ne.s32.totalorder %s51, %s65
      %p67 = scmp.eq.s32.totalorder %s20, 0
      %p68 = por %p66, %p67
      %s70 = sadd.s32 %s69, 1
      %p73 = scmp.eq.s32.totalorder %s14, 1
      %p74 = scmp.ne.s32.totalorder %s69, %s71
      %p75 = scmp.eq.s32.totalorder %s14, 0
      %p76 = por %p74, %p75
      %p77 = scmp.ne.s32.totalorder %s69, %s71
      %p78 = scmp.eq.s32.totalorder %s19, 1
      %p79 = por %p77, %p78
      %p80 = scmp.ne.s32.totalorder %s71, %s72
      %p81 = scmp.eq.s32.totalorder %s19, 0
      %p82 = por %p80, %p81
      %p83 = scmp.ne.s32.totalorder %s71, %s72
      %p84 = scmp.eq.s32.totalorder %s20, 1
      %p85 = por %p83, %p84
      %p87 = scmp.ne.s32.totalorder %s72, %s86
      %p88 = scmp.eq.s32.totalorder %s20, 0
      %p89 = por %p87, %p88
      %s91 = sadd.s32 %s90, 1
      %p94 = scmp.eq.s32.totalorder %s14, 1
      %p95 = scmp.ne.s32.totalorder %s90, %s92
      %p96 = scmp.eq.s32.totalorder %s14, 0
      %p97 = por %p95, %p96
      %p98 = scmp.ne.s32.totalorder %s90, %s92
      %p99 = scmp.eq.s32.totalorder %s19, 1
      %p100 = por %p98, %p99
      %p101 = scmp.ne.s32.totalorder %s92, %s93
      %p102 = scmp.eq.s32.totalorder %s19, 0
      %p103 = por %p101, %p102
      %p104 = scmp.ne.s32.totalorder %s92, %s93
      %p105 = scmp.eq.s32.totalorder %s20, 1
      %p106 = por %p104, %p105
      %p108 = scmp.ne.s32.totalorder %s93, %s107
      %p109 = scmp.eq.s32.totalorder %s20, 0
      %p110 = por %p108, %p109
      %s112 = sadd.s32 %s111, 1
      %p115 = scmp.eq.s32.totalorder %s14, 1
      %p116 = scmp.ne.s32.totalorder %s111, %s113
      %p117 = scmp.eq.s32.totalorder %s14, 0
      %p118 = por %p116, %p117
      %p119 = scmp.ne.s32.totalorder %s111, %s113
      %p120 = scmp.eq.s32.totalorder %s19, 1
      %p121 = por %p119, %p120
      %p122 = scmp.ne.s32.totalorder %s113, %s114
      %p123 = scmp.eq.s32.totalorder %s19, 0
      %p124 = por %p122, %p123
      %p125 = scmp.ne.s32.totalorder %s113, %s114
      %p126 = scmp.eq.s32.totalorder %s20, 1
      %p127 = por %p125, %p126
      %p129 = scmp.ne.s32.totalorder %s114, %s128
      %p130 = scmp.eq.s32.totalorder %s20, 0
      %p131 = por %p129, %p130
      %s132 = ssub.s32 %s14, %s21
      %p133 = scmp.eq.s32.totalorder %s132, 0
      %s135 = sadd.s32 %s134, 1
      %s136 = scalar_select %p133, %s134, %s135
      %p139 = pneg %p133
      %p140 = scmp.eq.s32.totalorder %s14, 1
      %p141 = por %p139, %p140
      %p142 = scmp.ne.s32.totalorder %s134, %s137
      %p143 = scmp.eq.s32.totalorder %s14, 0
      %p144 = por %p142, %p143
      %p145 = scmp.ne.s32.totalorder %s134, %s137
      %p146 = scmp.eq.s32.totalorder %s19, 1
      %p147 = por %p145, %p146
      %p148 = scmp.ne.s32.totalorder %s137, %s138
      %p149 = scmp.eq.s32.totalorder %s19, 0
      %p150 = por %p148, %p149
      %p151 = scmp.ne.s32.totalorder %s137, %s138
      %p152 = scmp.eq.s32.totalorder %s20, 1
      %p153 = por %p151, %p152
      %p155 = scmp.ne.s32.totalorder %s138, %s154
      %p156 = scmp.eq.s32.totalorder %s20, 0
      %p157 = por %p155, %p156
      %p158 = scmp.le.s32.totalorder 1, %s14
      %p159 = scmp.lt.s32.totalorder %s14, 3
      %p160 = pnand %p158, %p159
      %p161 = pneg %p160
      // Predicated region
      $region9: #{tpu_custom_call.1} parent=5 // pred_check
        _
      $region10: #{tpu_custom_call.1} parent=5 // pred_check_branch
        %163 = sbr.rel (%p160) target = $region12
      $region11: #{tpu_custom_call.1} parent=5 // pred_region
        %s164 = ssub.s32 %s14, 1
        // Predicated region
        $region13: #{tpu_custom_call.1} parent=11 // pred_check
          %p165 = pneg %p61
        $region14: #{tpu_custom_call.1} parent=11 // pred_check_branch
          %167 = sbr.rel (%p165) target = $region16
        $region15: #{tpu_custom_call.1} parent=11 // pred_region
          _
        $region16: #{tpu_custom_call.1} parent=11 // pred_fallthru
          _
        // Predicated region
        $region17: #{tpu_custom_call.1} parent=11 // pred_check
          %p168 = pneg %p82
        $region18: #{tpu_custom_call.1} parent=11 // pred_check_branch
          %170 = sbr.rel (%p168) target = $region20
        $region19: #{tpu_custom_call.1} parent=11 // pred_region
          _
        $region20: #{tpu_custom_call.1} parent=11 // pred_fallthru
          _
        // Predicated region
        $region21: #{tpu_custom_call.1} parent=11 // pred_check
          %p171 = pneg %p103
        $region22: #{tpu_custom_call.1} parent=11 // pred_check_branch
          %173 = sbr.rel (%p171) target = $region24
        $region23: #{tpu_custom_call.1} parent=11 // pred_region
          _
        $region24: #{tpu_custom_call.1} parent=11 // pred_fallthru
          _
        // Predicated region
        $region25: #{tpu_custom_call.1} parent=11 // pred_check
          %p174 = pneg %p124
        $region26: #{tpu_custom_call.1} parent=11 // pred_check_branch
          %176 = sbr.rel (%p174) target = $region28
        $region27: #{tpu_custom_call.1} parent=11 // pred_region
          _
        $region28: #{tpu_custom_call.1} parent=11 // pred_fallthru
          _
      $region12: #{tpu_custom_call.1} parent=5 // pred_fallthru
        _
      %p177 = scmp.lt.s32.totalorder %s14, 2
      // Predicated region
      $region29: #{tpu_custom_call.1} parent=5 // pred_check
        %p178 = pneg %p177
      $region30: #{tpu_custom_call.1} parent=5 // pred_check_branch
        %180 = sbr.rel (%p178) target = $region32
      $region31: #{tpu_custom_call.1} parent=5 // pred_region
        // Predicated region
        $region33: #{tpu_custom_call.1} parent=31 // pred_check
          %p181 = pneg %p34
        $region34: #{tpu_custom_call.1} parent=31 // pred_check_branch
          %183 = sbr.rel (%p181) target = $region36
        $region35: #{tpu_custom_call.1} parent=31 // pred_region
          %p184 = scmp.lt.s32.totalorder %s14, 1
          %s185 = scalar_select %p184, %s14, 1
          %s186 = smul.addr %s185, 4
          %s187 = scalar_lea.vmem %s0, %s186
        $region36: #{tpu_custom_call.1} parent=31 // pred_fallthru
          _
      $region32: #{tpu_custom_call.1} parent=5 // pred_fallthru
        _
      %p188 = scmp.le.s32.totalorder 1, %s14
      %p189 = scmp.lt.s32.totalorder %s14, 3
      %p190 = pnand %p188, %p189
      %p191 = pneg %p190
      // Predicated region
      $region37: #{tpu_custom_call.1} parent=5 // pred_check
        _
      $region38: #{tpu_custom_call.1} parent=5 // pred_check_branch
        %193 = sbr.rel (%p190) target = $region40
      $region39: #{tpu_custom_call.1} parent=5 // pred_region
        %s194 = ssub.s32 %s14, 1
        %p195 = scmp.lt.s32.totalorder %s19, 1
        %s196 = scalar_select %p195, %s19, 1
        %s197 = smul.addr %s196, 4
        %s198 = scalar_lea.vmem %s0, %s197
        %p199 = pneg %p40
        %p200 = pneg %p37
        %p201 = pneg %p61
        %p202 = pneg %p58
        %p203 = pneg %p82
        %p204 = pneg %p79
        %p205 = pneg %p103
        %p206 = pneg %p100
        %p207 = pneg %p124
        %p208 = pneg %p121
        %p209 = pneg %p150
        %p210 = pneg %p147
        %s211 = sand.u32 %s137, 1
        %s212 = scalar_lea.sflag [#allocation3], %s211
        %s213 = sand.u32 %s137, 1
        %s214 = smul.addr %s213, 4
        %s215 = scalar_lea.vmem [#allocation2], %s214
        %p216 = scmp.lt.s32.totalorder %s19, 1
        %s217 = scalar_select %p216, %s19, 1
        %s218 = smul.addr %s217, 4
        %s219 = scalar_lea.vmem %s0, %s218
        %v220 = vld [vmem:[%s219] sm:$0xf]
        %vm221 = vcmask 125952
        %v222 = vsel %vm221, %v220, 0.0
        %223 = vadd.xlane.f32.xlu0 %v222
        %v224 = vpop.xlane.xlu0 %223
        %v225 = vld [vmem:[%s1] sm:$0xf]
        %v226 = vld [vmem:[%s2] sm:$0x1]
        %v228 = vlaneseq
        %v229 = vand.u32 %v228, 127
        %v230 = vperm.slane %v224, %v229
        %vm231 = vcmask 31744
        %v232 = vsel %vm231, %v230, 0
        %vm234 = vcmask 1043456
        %v236 = vsel %vm234, %v225, 0
        %238 = vmatpush.msra.mxu0 0.0
        %239 = vmatpush.msra.mxu0 0.0
        %240 = vmatpush.msra.mxu0 0.0
        %241 = vmatpush.msra.mxu0 0.0
        %242 = vmatpush.msra.mxu0 0.0
        %243 = vmatpush.msra.mxu0 0.0
        %244 = vmatpush.msra.mxu0 0.0
        %245 = vmatpush.msra.mxu0 0.0
        %246 = vmatpush.msra.mxu0 0.0
        %247 = vmatpush.msra.mxu0 0.0
        %248 = vmatpush.msra.mxu0 0.0
        %249 = vmatpush.msra.mxu0 0.0
        %250 = vmatpush.msra.mxu0 0.0
        %251 = vmatpush.msra.mxu0 0.0
        %252 = vmatpush.msra.mxu0 0.0
        %253 = vmatpush.msra.mxu0 %v236
        %254 = vmatmul.f32.gmra.mxu0 %v232
        %v255 = vpop.f32.mrf.mxu0
        %v256 = vadd.f32 %v226, %v255
        %257 = vdwg.mxu0
        %v258 = vmax.f32 %v256, 0.0
        %v259 = vld [vmem:[%s3] sm:$0xff]
        %v260 = vld [vmem:[%s4] sm:$0x1]
        %vm261 = vcmask 64512
        %v263 = vsel %vm261, %v258, 0
        %265 = vmatpush.msra.mxu0 0.0
        %266 = vmatpush.msra.mxu0 0.0
        %267 = vmatpush.msra.mxu0 0.0
        %268 = vmatpush.msra.mxu0 0.0
        %269 = vmatpush.msra.mxu0 0.0
        %270 = vmatpush.msra.mxu0 0.0
        %271 = vmatpush.msra.mxu0 0.0
        %272 = vmatpush.msra.mxu0 0.0
        %273 = vmatpush.msra.mxu0 0.0
        %274 = vmatpush.msra.mxu0 0.0
        %275 = vmatpush.msra.mxu0 0.0
        %276 = vmatpush.msra.mxu0 0.0
        %277 = vmatpush.msra.mxu0 0.0
        %278 = vmatpush.msra.mxu0 0.0
        %279 = vmatpush.msra.mxu0 0.0
        %280 = vmatpush.msra.mxu0 %v259
        %281 = vmatmul.f32.gmra.mxu0 %v263
        %v282 = vpop.f32.mrf.mxu0
        %v283 = vadd.f32 %v260, %v282
        %284 = vdwg.mxu0
        %v285 = vsub.f32 0.0, %v283
        %v286 = vmul.f32 %v285, 1.442695
        %v287 = vpow.pop %v286
        %v288 = vadd.f32 %v287, 1.0
        %v289 = vrcp.pop %v288
        %v290 = vmul.f32 %v288, %v289
        %v291 = vsub.f32 1.0, %v290
        %v292 = vmul.f32 %v289, %v291
        %v293 = vadd.f32 %v289, %v292
        %vm294 = vweird.f32 %v288
        %vm295 = vweird.f32 %v289
        %vm296 = vmor %vm294, %vm295
        %v297 = vsel %vm296, %v289, %v293
        %v298 = vand.u32 2147483647, %v288
        %vm299 = vcmp.eq.f32.partialorder %v298, 8.507059e+37
        %v300 = vand.u32 %v288, 2147483648
        %v301 = vor.u32 1.1754944e-38, %v300
        %v302 = vsel %vm299, %v301, %v297
        %v303 = vmul.f32 1.0, %v302
        %v304 = vperm.slane %v303, 0
        %v305 = vlaneseq
        %v306 = vshrl.u32 %v305, 7
        %308 = vset.pattern.permute.xlu0 %v306
        %309 = vperm.xlu0 %308, %v304
        %v310 = vpop.permute.xlu0 %309
        %v311 = vmul.f32 %v310, %v220
        %312 = vst.msk [vmem:[%s215] sm:$0xf] %vm221, %v311
        %s313 = sand.u32 %s137, 1
        %s314 = scalar_lea.sflag [#allocation3], %s313
        %s315 = sand.u32 %s137, 1
        %s316 = smul.addr %s315, 4
        %s317 = scalar_lea.vmem [#allocation2], %s316
        // Predicated region
        $region41: #{tpu_custom_call.1} parent=39 // pred_check
          %p318 = pneg %p147
        $region42: #{tpu_custom_call.1} parent=39 // pred_check_branch
          %320 = sbr.rel (%p318) target = $region44
        $region43: #{tpu_custom_call.1} parent=39 // pred_region
          %322 = vsyncadd %s314, 0
          %s323 = smul.addr %s19, 4
          %s324 = scalar_lea.hbm %s5, %s323
          %s326 = sshll.u32 %s317, 4
          %s327 = int_to_ptr.vmem [resolvable:$true] %s326
          %s328 = sshll.u32 %s324, 4
          %s329 = int_to_ptr.hbm [resolvable:$true] %s328
          %331 = dma.vmem_to_hbm [thread:$0]  %s327, 64, %s329, %s314
        $region44: #{tpu_custom_call.1} parent=39 // pred_fallthru
          _
      $region40: #{tpu_custom_call.1} parent=5 // pred_fallthru
        _
      %p332 = scmp.le.s32.totalorder 2, %s14
      // Predicated region
      $region45: #{tpu_custom_call.1} parent=5 // pred_check
        %p333 = pneg %p332
      $region46: #{tpu_custom_call.1} parent=5 // pred_check_branch
        %335 = sbr.rel (%p333) target = $region48
      $region47: #{tpu_custom_call.1} parent=5 // pred_region
        %s336 = ssub.s32 %s14, 2
        // Predicated region
        $region49: #{tpu_custom_call.1} parent=47 // pred_check
          %p337 = pneg %p153
        $region50: #{tpu_custom_call.1} parent=47 // pred_check_branch
          %339 = sbr.rel (%p337) target = $region52
        $region51: #{tpu_custom_call.1} parent=47 // pred_region
          %s340 = sand.u32 %s138, 1
          %s341 = scalar_lea.sflag [#allocation3], %s340
          %s342 = sand.u32 %s138, 1
          %s343 = smul.addr %s342, 4
          %s344 = scalar_lea.vmem [#allocation2], %s343
          %346 = dma.done %s341, 64
        $region52: #{tpu_custom_call.1} parent=47 // pred_fallthru
          _
      $region48: #{tpu_custom_call.1} parent=5 // pred_fallthru
        _
    $region6: #{tpu_custom_call.1} parent=1 // loop_footer
      %s18 = sadd.s32 1, %s14
    $region7: #{tpu_custom_call.1} parent=1 // loop_footer_branch
      %13 = sbr.rel target = $region3
    $region8: #{tpu_custom_call.1} parent=1 // loop_exit
      _
    %347 = vsyncpa [#allocation3], 1
    %s348 = scalar_lea.sflag [#allocation3], 1
    %349 = vsyncpa %s348, 1

</llo_original>
